<compile_context>
chip_gen: v7x
topology: tpu7x:2x2x1
jax: 0.10.0
libtpu: 0.0.40
codegen_flags: <defaults>
</compile_context>

<pallas_src>
import functools
import math

import jax
import jax.numpy as jnp
from jax.experimental import pallas as pl
from jax.experimental.pallas import tpu as pltpu

_LANE = 128      # last-dim (lane) granularity
_SUBLANE = 8     # second-to-last (sublane) granularity


def _round_up(x, m):
    return ((x + m - 1) // m) * m


def _mlp_kernel(x_ref, w1_ref, b1_ref, w2_ref, b2_ref, w3_ref, b3_ref, o_ref):
    """Fused forward: relu(x @ w1 + b1) @ w2 + b2, then @ w3 + b3.

    Matmul inputs go to the MXU in the weights' dtype (bf16 by default), accumulation is
    f32 via preferred_element_type, bias/ReLU run in f32, final store in o_ref.dtype (f32).
    """
    mxu_dtype = w1_ref.dtype
    x = x_ref[...].astype(mxu_dtype)

    h1 = jnp.dot(x, w1_ref[...], preferred_element_type=jnp.float32) + b1_ref[...]
    h1 = jnp.maximum(h1, 0.0).astype(mxu_dtype)          # F.relu, then narrow for the MXU

    h2 = jnp.dot(h1, w2_ref[...], preferred_element_type=jnp.float32) + b2_ref[...]
    h2 = h2.astype(mxu_dtype)

    out = jnp.dot(h2, w3_ref[...], preferred_element_type=jnp.float32) + b3_ref[...]
    o_ref[...] = out.astype(o_ref.dtype)


@functools.partial(jax.jit, static_argnames=("n_output", "block_b"))
def net0_forward(x, kparams, *, n_output, block_b=512):
    """Runs Net_0.forward.

    x:        (B, n_feature) array (any float dtype; cast to f32 like `x.float()`).
    kparams:  dict from prepare_kernel_params() (padded, transposed, bf16/f32 weights).
    n_output: logical output width (padded columns are sliced off).
    """
    w1, b1 = kparams["w1"], kparams["b1"]
    w2, b2 = kparams["w2"], kparams["b2"]
    w3, b3 = kparams["w3"], kparams["b3"]

    B, F = x.shape
    Fp, Hp = w1.shape
    Op = w3.shape[1]

    # --- mirror `x = x.float()`, then pad the feature dim to the lane-dense padded width ---
    x = x.astype(jnp.float32)
    if Fp != F:
        x = jnp.pad(x, ((0, 0), (0, Fp - F)))
    # Feed the DMA/MXU in the compute dtype (halves HBM traffic for x when bf16).
    x = x.astype(w1.dtype)

    # --- batch tiling: large tile, no divisibility requirement (pad instead of assert) ---
    B8 = _round_up(B, _SUBLANE)
    bb = max(_SUBLANE, min(block_b, B8))
    # v7x has two TensorCores: expose >= 2 parallel grid steps when the batch is big enough.
    if (B8 // bb) < 2 and B8 >= 2 * _LANE:
        bb = _round_up(-(-B8 // 2), _SUBLANE)
    Bp = _round_up(B8, bb)
    if Bp != B:
        x = jnp.pad(x, ((0, Bp - B), (0, 0)))
    grid = (Bp // bb,)

    # --- explicit scoped-VMEM budget (weights conservatively counted double-buffered) ---
    wbytes = jnp.dtype(w1.dtype).itemsize
    weight_bytes = (Fp * Hp + Hp * Hp + Hp * Op) * wbytes + (2 * Hp + Op) * 4
    vmem_est = (
        2 * bb * Fp * wbytes      # double-buffered x tiles
        + 2 * bb * Op * 4         # double-buffered f32 output tiles
        + 2 * weight_bytes        # resident weights/biases
        + 2 * bb * Hp * 4         # live f32 intermediates (h1, h2)
        + bb * Hp * wbytes        # narrowed copies fed back to the MXU
    )
    vmem_limit = int(min(max(2 * vmem_est, 32 * 1024 * 1024), 48 * 1024 * 1024))

    def _resident(shape):
        # Constant block index -> fetched once, stays resident in VMEM for every grid step.
        return pl.BlockSpec(shape, lambda i: (0, 0))

    in_specs = [
        pl.BlockSpec((bb, Fp), lambda i: (i, 0)),   # x tile (batch-tiled)
        _resident((Fp, Hp)),                        # w1
        _resident((1, Hp)),                         # b1
        _resident((Hp, Hp)),                        # w2
        _resident((1, Hp)),                         # b2
        _resident((Hp, Op)),                        # w3
        _resident((1, Op)),                         # b3
    ]
    out_specs = pl.BlockSpec((bb, Op), lambda i: (i, 0))

    out_padded = pl.pallas_call(
        _mlp_kernel,
        out_shape=jax.ShapeDtypeStruct((Bp, Op), jnp.float32),
        grid=grid,
        in_specs=in_specs,
        out_specs=out_specs,
        compiler_params=pltpu.CompilerParams(
            dimension_semantics=("parallel",),
            vmem_limit_bytes=vmem_limit,
        ),
    )(x, w1, b1, w2, b2, w3, b3)

    return out_padded[:B, :n_output]


def init_net0_params(key, n_feature, n_hidden, n_output):
    """Torch nn.Linear-style init (U[-1/sqrt(fan_in), 1/sqrt(fan_in)]).

    Logical (unpadded) f32 params; weights stored pre-transposed as (in, out)."""
    ks = jax.random.split(key, 6)

    def lin(kw, kb, fan_in, fan_out):
        bound = 1.0 / math.sqrt(fan_in)
        w = jax.random.uniform(kw, (fan_in, fan_out), jnp.float32, -bound, bound)
        b = jax.random.uniform(kb, (fan_out,), jnp.float32, -bound, bound)
        return w, b

    w1, b1 = lin(ks[0], ks[1], n_feature, n_hidden)
    w2, b2 = lin(ks[2], ks[3], n_hidden, n_hidden)
    w3, b3 = lin(ks[4], ks[5], n_hidden, n_output)
    return {"w1": w1, "b1": b1, "w2": w2, "b2": b2, "w3": w3, "b3": b3}


def prepare_kernel_params(params, compute_dtype=jnp.bfloat16):
    """Zero-pad every layer dim to a multiple of 128 (lane-dense MXU feed / output slab),
    cast weights to `compute_dtype` (bf16 default), keep biases in f32 as (1, out) rows.
    Zero padding leaves the computed values exactly unchanged."""

    def pad_w(w):
        fi, fo = w.shape
        wp = jnp.pad(w, ((0, _round_up(fi, _LANE) - fi), (0, _round_up(fo, _LANE) - fo)))
        return wp.astype(compute_dtype)

    def pad_b(b):
        fo = b.shape[0]
        bp = jnp.pad(b, (0, _round_up(fo, _LANE) - fo))
        return bp.reshape(1, -1).astype(jnp.float32)

    return {
        "w1": pad_w(params["w1"]), "b1": pad_b(params["b1"]),
        "w2": pad_w(params["w2"]), "b2": pad_b(params["b2"]),
        "w3": pad_w(params["w3"]), "b3": pad_b(params["b3"]),
    }


def _reference_forward_f32(x, p):
    """Plain-JAX f32 reference identical to Net_0.forward."""
    x = x.astype(jnp.float32)
    h1 = jnp.maximum(x @ p["w1"] + p["b1"], 0.0)
    h2 = h1 @ p["w2"] + p["b2"]
    return h2 @ p["w3"] + p["b3"]


def _reference_forward_matched(x, p, compute_dtype=jnp.bfloat16):
    """Plain-JAX reference with the same dtype flow as the kernel (bf16 MXU, f32 accumulate)."""
    cd = compute_dtype
    x = x.astype(jnp.float32).astype(cd)
    h1 = jnp.dot(x, p["w1"].astype(cd), preferred_element_type=jnp.float32) + p["b1"]
    h1 = jnp.maximum(h1, 0.0).astype(cd)
    h2 = jnp.dot(h1, p["w2"].astype(cd), preferred_element_type=jnp.float32) + p["b2"]
    h2 = h2.astype(cd)
    return jnp.dot(h2, p["w3"].astype(cd), preferred_element_type=jnp.float32) + p["b3"]


if __name__ == "__main__":
    key = jax.random.PRNGKey(0)
    k_param, k_x = jax.random.split(key)

    batch, n_feature, n_hidden, n_output = 8, 32, 32, 8
    params = init_net0_params(k_param, n_feature, n_hidden, n_output)
    kparams = prepare_kernel_params(params, compute_dtype=jnp.bfloat16)
    x = jax.random.normal(k_x, (batch, n_feature), dtype=jnp.float32)

    out = net0_forward(x, kparams, n_output=n_output, block_b=512)
    out = jax.block_until_ready(out)
    assert out.shape == (batch, n_output)

    # Tight check vs a pure-JAX reference with the identical dtype flow.
    ref_matched = _reference_forward_matched(x, params)
    assert jnp.allclose(out, ref_matched, atol=2e-3, rtol=2e-3), "mismatch vs matched-dtype reference"

    # Sanity check vs the exact f32 Net_0 semantics (bf16 MXU feed -> loose tolerance).
    ref_f32 = _reference_forward_f32(x, params)
    assert jnp.allclose(out, ref_f32, atol=5e-2, rtol=5e-2), "mismatch vs f32 reference"

    print("KERNEL_OK")
</pallas_src>

<mosaic_0001>
module attributes {stable_mosaic.version = 11 : i64} {
  func.func @_mlp_kernel(%arg0: i32, %arg1: memref<8x128xbf16, #tpu.memory_space<vmem>>, %arg2: memref<128x128xbf16, #tpu.memory_space<vmem>>, %arg3: memref<1x128xf32, #tpu.memory_space<vmem>>, %arg4: memref<128x128xbf16, #tpu.memory_space<vmem>>, %arg5: memref<1x128xf32, #tpu.memory_space<vmem>>, %arg6: memref<128x128xbf16, #tpu.memory_space<vmem>>, %arg7: memref<1x128xf32, #tpu.memory_space<vmem>>, %arg8: memref<8x128xf32, #tpu.memory_space<vmem>>) attributes {dimension_semantics = [#tpu.dimension_semantics<parallel>], iteration_bounds = array<i64: 1>, scalar_prefetch = 0 : i64, scratch_operands = 0 : i64, tpu.core_type = #tpu.core_type<tc>, window_params = [{transform_indices = @transform_0, window_bounds = array<i64: 8, 128>}, {pipeline_mode = #tpu.pipeline_mode<synchronous>, transform_indices = @transform_1, window_bounds = array<i64: 128, 128>}, {pipeline_mode = #tpu.pipeline_mode<synchronous>, transform_indices = @transform_2, window_bounds = array<i64: 1, 128>}, {pipeline_mode = #tpu.pipeline_mode<synchronous>, transform_indices = @transform_3, window_bounds = array<i64: 128, 128>}, {pipeline_mode = #tpu.pipeline_mode<synchronous>, transform_indices = @transform_4, window_bounds = array<i64: 1, 128>}, {pipeline_mode = #tpu.pipeline_mode<synchronous>, transform_indices = @transform_5, window_bounds = array<i64: 128, 128>}, {pipeline_mode = #tpu.pipeline_mode<synchronous>, transform_indices = @transform_6, window_bounds = array<i64: 1, 128>}, {transform_indices = @transform_7, window_bounds = array<i64: 8, 128>}]} {
    %c0 = arith.constant 0 : index
    %c0_0 = arith.constant 0 : index
    %0 = vector.load %arg1[%c0, %c0_0] : memref<8x128xbf16, #tpu.memory_space<vmem>>, vector<8x128xbf16>
    %c0_1 = arith.constant 0 : index
    %c0_2 = arith.constant 0 : index
    %1 = vector.load %arg2[%c0_1, %c0_2] : memref<128x128xbf16, #tpu.memory_space<vmem>>, vector<128x128xbf16>
    %cst = arith.constant dense<0.000000e+00> : vector<8x128xf32>
    %2 = tpu.matmul %0, %1, %cst {dimension_numbers = #tpu.dot_dimension_numbers<[1], [0], [0], [1], [0, 0, 1, 1], [], []>} : vector<8x128xbf16>, vector<128x128xbf16>, vector<8x128xf32> -> vector<8x128xf32>
    %c0_3 = arith.constant 0 : index
    %c0_4 = arith.constant 0 : index
    %3 = vector.load %arg3[%c0_3, %c0_4] : memref<1x128xf32, #tpu.memory_space<vmem>>, vector<1x128xf32>
    %4 = vector.broadcast %3 : vector<1x128xf32> to vector<8x128xf32>
    %5 = arith.addf %2, %4 : vector<8x128xf32>
    %cst_5 = arith.constant 0.000000e+00 : f32
    %6 = vector.broadcast %cst_5 : f32 to vector<8x128xf32>
    %7 = arith.maximumf %5, %6 : vector<8x128xf32>
    %8 = arith.truncf %7 : vector<8x128xf32> to vector<8x128xbf16>
    %c0_6 = arith.constant 0 : index
    %c0_7 = arith.constant 0 : index
    %9 = vector.load %arg4[%c0_6, %c0_7] : memref<128x128xbf16, #tpu.memory_space<vmem>>, vector<128x128xbf16>
    %cst_8 = arith.constant dense<0.000000e+00> : vector<8x128xf32>
    %10 = tpu.matmul %8, %9, %cst_8 {dimension_numbers = #tpu.dot_dimension_numbers<[1], [0], [0], [1], [0, 0, 1, 1], [], []>} : vector<8x128xbf16>, vector<128x128xbf16>, vector<8x128xf32> -> vector<8x128xf32>
    %c0_9 = arith.constant 0 : index
    %c0_10 = arith.constant 0 : index
    %11 = vector.load %arg5[%c0_9, %c0_10] : memref<1x128xf32, #tpu.memory_space<vmem>>, vector<1x128xf32>
    %12 = vector.broadcast %11 : vector<1x128xf32> to vector<8x128xf32>
    %13 = arith.addf %10, %12 : vector<8x128xf32>
    %14 = arith.truncf %13 : vector<8x128xf32> to vector<8x128xbf16>
    %c0_11 = arith.constant 0 : index
    %c0_12 = arith.constant 0 : index
    %15 = vector.load %arg6[%c0_11, %c0_12] : memref<128x128xbf16, #tpu.memory_space<vmem>>, vector<128x128xbf16>
    %cst_13 = arith.constant dense<0.000000e+00> : vector<8x128xf32>
    %16 = tpu.matmul %14, %15, %cst_13 {dimension_numbers = #tpu.dot_dimension_numbers<[1], [0], [0], [1], [0, 0, 1, 1], [], []>} : vector<8x128xbf16>, vector<128x128xbf16>, vector<8x128xf32> -> vector<8x128xf32>
    %c0_14 = arith.constant 0 : index
    %c0_15 = arith.constant 0 : index
    %17 = vector.load %arg7[%c0_14, %c0_15] : memref<1x128xf32, #tpu.memory_space<vmem>>, vector<1x128xf32>
    %18 = vector.broadcast %17 : vector<1x128xf32> to vector<8x128xf32>
    %19 = arith.addf %16, %18 : vector<8x128xf32>
    %c0_16 = arith.constant 0 : index
    %c0_17 = arith.constant 0 : index
    %20 = vector.load %arg8[%c0_16, %c0_17] : memref<8x128xf32, #tpu.memory_space<vmem>>, vector<8x128xf32>
    tpu.vector_store %arg8[%c0_16, %c0_17], %19 {strides = array<i32>} : memref<8x128xf32, #tpu.memory_space<vmem>>, vector<8x128xf32>,
    return
  }
  func.func @transform_0(%arg0: i32) -> (i32, i32) {
    %c0_i32 = arith.constant 0 : i32
    %c0_i32_0 = arith.constant 0 : i32
    return %arg0, %c0_i32 : i32, i32
  }
  func.func @transform_1(%arg0: i32) -> (i32, i32) {
    %c0_i32 = arith.constant 0 : i32
    %c0_i32_0 = arith.constant 0 : i32
    %c0_i32_1 = arith.constant 0 : i32
    return %c0_i32, %c0_i32_0 : i32, i32
  }
  func.func @transform_2(%arg0: i32) -> (i32, i32) {
    %c0_i32 = arith.constant 0 : i32
    %c0_i32_0 = arith.constant 0 : i32
    %c0_i32_1 = arith.constant 0 : i32
    return %c0_i32, %c0_i32_0 : i32, i32
  }
  func.func @transform_3(%arg0: i32) -> (i32, i32) {
    %c0_i32 = arith.constant 0 : i32
    %c0_i32_0 = arith.constant 0 : i32
    %c0_i32_1 = arith.constant 0 : i32
    return %c0_i32, %c0_i32_0 : i32, i32
  }
  func.func @transform_4(%arg0: i32) -> (i32, i32) {
    %c0_i32 = arith.constant 0 : i32
    %c0_i32_0 = arith.constant 0 : i32
    %c0_i32_1 = arith.constant 0 : i32
    return %c0_i32, %c0_i32_0 : i32, i32
  }
  func.func @transform_5(%arg0: i32) -> (i32, i32) {
    %c0_i32 = arith.constant 0 : i32
    %c0_i32_0 = arith.constant 0 : i32
    %c0_i32_1 = arith.constant 0 : i32
    return %c0_i32, %c0_i32_0 : i32, i32
  }
  func.func @transform_6(%arg0: i32) -> (i32, i32) {
    %c0_i32 = arith.constant 0 : i32
    %c0_i32_0 = arith.constant 0 : i32
    %c0_i32_1 = arith.constant 0 : i32
    return %c0_i32, %c0_i32_0 : i32, i32
  }
  func.func @transform_7(%arg0: i32) -> (i32, i32) {
    %c0_i32 = arith.constant 0 : i32
    %c0_i32_0 = arith.constant 0 : i32
    return %arg0, %c0_i32 : i32, i32
  }
}

</mosaic_0001>

<llo_original>
// kernel: net0_forward.1
$region0: #{net0_forward.1}
  #allocation0 [shape = 'u32[]', space=smem, size = 0x4, offset = 0x4, fixed_abs, tag = 'smem constant byte address 0x4 - core index']
  #allocation1 [shape = 'u32[144,128]{1,0:T(1,128)}', space=vmem, size = 0x12000, scoped, tag = 'internal scratch']
  %s0 = inlined_call_operand.vmem [shape: bf16[8,128], index: 0, kind: input, shape index: {}]
  %s1 = inlined_call_operand.hbm [shape: bf16[128,128], index: 1, kind: input, shape index: {}]
  %s2 = inlined_call_operand.vmem [shape: f32[1,128], index: 2, kind: input, shape index: {}]
  %s3 = inlined_call_operand.hbm [shape: bf16[128,128], index: 3, kind: input, shape index: {}]
  %s4 = inlined_call_operand.vmem [shape: f32[1,128], index: 4, kind: input, shape index: {}]
  %s5 = inlined_call_operand.hbm [shape: bf16[128,128], index: 5, kind: input, shape index: {}]
  %s6 = inlined_call_operand.vmem [shape: f32[1,128], index: 6, kind: input, shape index: {}]
  %s7 = inlined_call_operand.hbm [shape: f32[8,128], index: 7, kind: output, shape index: {}]
  %s8 = sld [smem:[#allocation0]]
  $region50: #{net0_forward.1} parent=0
    _
  %s10 = ssub.s32 1, %s8
  %s11 = scalar_select 0, %s10, %s8
  $region1: #{net0_forward.1} parent=0
    #allocation2 [shape = 'u8[32768]{0}', space=vmem, size = 0x8000, scoped, tag = 'input window, operand 1, single buffered']
    #allocation3 [shape = 's32[1]{0}', space=sflag, size = 0x4, scoped, tag = 'scoped memory for net0_forward.1']
    #allocation4 [shape = 's32[1]{0}', space=sflag, size = 0x4, scoped, tag = 'scoped memory for net0_forward.1']
    #allocation5 [shape = 'u8[32768]{0}', space=vmem, size = 0x8000, scoped, tag = 'input window, operand 3, single buffered']
    #allocation6 [shape = 's32[1]{0}', space=sflag, size = 0x4, scoped, tag = 'scoped memory for net0_forward.1']
    #allocation7 [shape = 'u8[32768]{0}', space=vmem, size = 0x8000, scoped, tag = 'input window, operand 5, single buffered']
    #allocation8 [shape = 'u8[4096]{0}', space=vmem, size = 0x1000, scoped, tag = 'output window, operand 0, single buffered']
    %12 = vsyncpa [#allocation3], 0
    %13 = vsyncpa [#allocation6], 0
    %14 = vsyncpa [#allocation4], 0
    // Predicated region
    $region2: #{net0_forward.1} parent=1 // pred_check
      _
    $region3: #{net0_forward.1} parent=1 // pred_check_branch
      %16 = sbr.rel (0) target = $region5
    $region4: #{net0_forward.1} parent=1 // pred_region
      _
    $region5: #{net0_forward.1} parent=1 // pred_fallthru
      _
    // Predicated region
    $region6: #{net0_forward.1} parent=1 // pred_check
      _
    $region7: #{net0_forward.1} parent=1 // pred_check_branch
      %18 = sbr.rel (0) target = $region9
    $region8: #{net0_forward.1} parent=1 // pred_region
      %s20 = ssub.s32 1024, 1024
      %21 = vsyncadd [#allocation3], %s20
      %s22 = sshll.u32 [#allocation2], 4
      %s23 = int_to_ptr.vmem [resolvable:$true] %s22
      %28 = dma.hbm_to_vmem [thread:$0]  %s1, 1024, %s23, [#allocation3], 64, 64, 4
    $region9: #{net0_forward.1} parent=1 // pred_fallthru
      _
    // Predicated region
    $region10: #{net0_forward.1} parent=1 // pred_check
      _
    $region11: #{net0_forward.1} parent=1 // pred_check_branch
      %30 = sbr.rel (0) target = $region13
    $region12: #{net0_forward.1} parent=1 // pred_region
      _
    $region13: #{net0_forward.1} parent=1 // pred_fallthru
      _
    // Predicated region
    $region14: #{net0_forward.1} parent=1 // pred_check
      _
    $region15: #{net0_forward.1} parent=1 // pred_check_branch
      %32 = sbr.rel (0) target = $region17
    $region16: #{net0_forward.1} parent=1 // pred_region
      %s34 = ssub.s32 1024, 1024
      %35 = vsyncadd [#allocation6], %s34
      %s36 = sshll.u32 [#allocation5], 4
      %s37 = int_to_ptr.vmem [resolvable:$true] %s36
      %42 = dma.hbm_to_vmem [thread:$0]  %s3, 1024, %s37, [#allocation6], 64, 64, 4
    $region17: #{net0_forward.1} parent=1 // pred_fallthru
      _
    // Predicated region
    $region18: #{net0_forward.1} parent=1 // pred_check
      _
    $region19: #{net0_forward.1} parent=1 // pred_check_branch
      %44 = sbr.rel (0) target = $region21
    $region20: #{net0_forward.1} parent=1 // pred_region
      _
    $region21: #{net0_forward.1} parent=1 // pred_fallthru
      _
    // Predicated region
    $region22: #{net0_forward.1} parent=1 // pred_check
      _
    $region23: #{net0_forward.1} parent=1 // pred_check_branch
      %46 = sbr.rel (0) target = $region25
    $region24: #{net0_forward.1} parent=1 // pred_region
      %s48 = ssub.s32 1024, 1024
      %49 = vsyncadd [#allocation6], %s48
      %s50 = sshll.u32 [#allocation7], 4
      %s51 = int_to_ptr.vmem [resolvable:$true] %s50
      %56 = dma.hbm_to_vmem [thread:$0]  %s5, 1024, %s51, [#allocation6], 64, 64, 4
    $region25: #{net0_forward.1} parent=1 // pred_fallthru
      _
    // Predicated region
    $region26: #{net0_forward.1} parent=1 // pred_check
      _
    $region27: #{net0_forward.1} parent=1 // pred_check_branch
      %58 = sbr.rel (0) target = $region29
    $region28: #{net0_forward.1} parent=1 // pred_region
      _
    $region29: #{net0_forward.1} parent=1 // pred_fallthru
      _
    // Predicated region
    $region30: #{net0_forward.1} parent=1 // pred_check
      _
    $region31: #{net0_forward.1} parent=1 // pred_check_branch
      %60 = sbr.rel (0) target = $region33
    $region32: #{net0_forward.1} parent=1 // pred_region
      %61 = dma.done [#allocation3], 1024
    $region33: #{net0_forward.1} parent=1 // pred_fallthru
      _
    // Predicated region
    $region34: #{net0_forward.1} parent=1 // pred_check
      _
    $region35: #{net0_forward.1} parent=1 // pred_check_branch
      %63 = sbr.rel (0) target = $region37
    $region36: #{net0_forward.1} parent=1 // pred_region
      %64 = dma.done [#allocation6], 1024
    $region37: #{net0_forward.1} parent=1 // pred_fallthru
      _
    // Predicated region
    $region38: #{net0_forward.1} parent=1 // pred_check
      _
    $region39: #{net0_forward.1} parent=1 // pred_check_branch
      %66 = sbr.rel (0) target = $region41
    $region40: #{net0_forward.1} parent=1 // pred_region
      %67 = dma.done [#allocation6], 1024
    $region41: #{net0_forward.1} parent=1 // pred_fallthru
      _
    %v69 = vld [vmem:[%s0] sm:$0xf]
    %v70 = vld [vmem:[#allocation2] sm:$0xf]
    %v71 = vld [vmem:[#allocation2 + $0x4] sm:$0xf]
    %v72 = vld [vmem:[#allocation2 + $0x8] sm:$0xf]
    %v73 = vld [vmem:[#allocation2 + $0xc] sm:$0xf]
    %v74 = vld [vmem:[#allocation2 + $0x10] sm:$0xf]
    %v75 = vld [vmem:[#allocation2 + $0x14] sm:$0xf]
    %v76 = vld [vmem:[#allocation2 + $0x18] sm:$0xf]
    %v77 = vld [vmem:[#allocation2 + $0x1c] sm:$0xf]
    %v78 = vld [vmem:[#allocation2 + $0x20] sm:$0xf]
    %v79 = vld [vmem:[#allocation2 + $0x24] sm:$0xf]
    %v80 = vld [vmem:[#allocation2 + $0x28] sm:$0xf]
    %v81 = vld [vmem:[#allocation2 + $0x2c] sm:$0xf]
    %v82 = vld [vmem:[#allocation2 + $0x30] sm:$0xf]
    %v83 = vld [vmem:[#allocation2 + $0x34] sm:$0xf]
    %v84 = vld [vmem:[#allocation2 + $0x38] sm:$0xf]
    %v85 = vld [vmem:[#allocation2 + $0x3c] sm:$0xf]
    %v86 = vld [vmem:[%s2] sm:$0x1]
    %v88 = vlaneseq
    %v89 = vshrl.u32 %v88, 7
    %v90 = vsub.s32 0, %v89
    %v91 = vrot.slane %v86, %v90
    %v109 = vunpack.c.l.b16 %v70
    %v110 = vunpack.c.l.b16 %v71
    %v111 = vunpack.c.l.b16 %v72
    %v112 = vunpack.c.l.b16 %v73
    %v113 = vunpack.c.l.b16 %v74
    %v114 = vunpack.c.l.b16 %v75
    %v115 = vunpack.c.l.b16 %v76
    %v116 = vunpack.c.l.b16 %v77
    %v117 = vunpack.c.l.b16 %v78
    %v118 = vunpack.c.l.b16 %v79
    %v119 = vunpack.c.l.b16 %v80
    %v120 = vunpack.c.l.b16 %v81
    %v121 = vunpack.c.l.b16 %v82
    %v122 = vunpack.c.l.b16 %v83
    %v123 = vunpack.c.l.b16 %v84
    %v124 = vunpack.c.l.b16 %v85
    %v125 = vpack.c.b16 %v110, %v109
    %v126 = vpack.c.b16 %v112, %v111
    %v127 = vpack.c.b16 %v114, %v113
    %v128 = vpack.c.b16 %v116, %v115
    %v129 = vpack.c.b16 %v118, %v117
    %v130 = vpack.c.b16 %v120, %v119
    %v131 = vpack.c.b16 %v122, %v121
    %v132 = vpack.c.b16 %v124, %v123
    %141 = vmatprep.subr.bf16.mxu0 0
    %142 = vmatpush1.bf16.msra.mxu0 %v125
    %143 = vmatprep.subr.bf16.mxu0 0
    %144 = vmatpush1.bf16.msra.mxu0 %v126
    %145 = vmatprep.subr.bf16.mxu0 0
    %146 = vmatpush1.bf16.msra.mxu0 %v127
    %147 = vmatprep.subr.bf16.mxu0 0
    %148 = vmatpush1.bf16.msra.mxu0 %v128
    %149 = vmatprep.subr.bf16.mxu0 0
    %150 = vmatpush1.bf16.msra.mxu0 %v129
    %151 = vmatprep.subr.bf16.mxu0 0
    %152 = vmatpush1.bf16.msra.mxu0 %v130
    %153 = vmatprep.subr.bf16.mxu0 0
    %154 = vmatpush1.bf16.msra.mxu0 %v131
    %155 = vmatprep.subr.bf16.mxu0 0
    %156 = vmatpush1.bf16.msra.mxu0 %v132
    %157 = vmatprep.subr.bf16.mxu0 0
    %158 = vmatpush1.bf16.msra.mxu0 0
    %159 = vmatprep.subr.bf16.mxu0 0
    %160 = vmatpush1.bf16.msra.mxu0 0
    %161 = vmatprep.subr.bf16.mxu0 0
    %162 = vmatpush1.bf16.msra.mxu0 0
    %163 = vmatprep.subr.bf16.mxu0 0
    %164 = vmatpush1.bf16.msra.mxu0 0
    %165 = vmatprep.subr.bf16.mxu0 0
    %166 = vmatpush1.bf16.msra.mxu0 0
    %167 = vmatprep.subr.bf16.mxu0 0
    %168 = vmatpush1.bf16.msra.mxu0 0
    %169 = vmatprep.subr.bf16.mxu0 0
    %170 = vmatpush1.bf16.msra.mxu0 0
    %171 = vmatprep.subr.bf16.mxu0 0
    %172 = vmatpush1.bf16.msra.mxu0 0
    %173 = vmatprep.mubr.bf16.mxu0 0
    %174 = vmatmul.mubr.bf16.gmra.mrb[0].mxu0 %v69
    %v175 = vpop.f32.mrb[0].mxu0
    %v176 = vadd.f32 %v91, %v175
    %v177 = vpop.f32.mrb[0].mxu0
    %v178 = vpop.f32.mrb[0].mxu0
    %v179 = vpop.f32.mrb[0].mxu0
    %180 = vdwg.mxu0
    %v181 = vmax.f32 %v176, 0.0
    %v182 = vpack.c.bf16 %v181, %v181
    %v183 = vld [vmem:[#allocation5] sm:$0xf]
    %v184 = vld [vmem:[#allocation5 + $0x4] sm:$0xf]
    %v185 = vld [vmem:[#allocation5 + $0x8] sm:$0xf]
    %v186 = vld [vmem:[#allocation5 + $0xc] sm:$0xf]
    %v187 = vld [vmem:[#allocation5 + $0x10] sm:$0xf]
    %v188 = vld [vmem:[#allocation5 + $0x14] sm:$0xf]
    %v189 = vld [vmem:[#allocation5 + $0x18] sm:$0xf]
    %v190 = vld [vmem:[#allocation5 + $0x1c] sm:$0xf]
    %v191 = vld [vmem:[#allocation5 + $0x20] sm:$0xf]
    %v192 = vld [vmem:[#allocation5 + $0x24] sm:$0xf]
    %v193 = vld [vmem:[#allocation5 + $0x28] sm:$0xf]
    %v194 = vld [vmem:[#allocation5 + $0x2c] sm:$0xf]
    %v195 = vld [vmem:[#allocation5 + $0x30] sm:$0xf]
    %v196 = vld [vmem:[#allocation5 + $0x34] sm:$0xf]
    %v197 = vld [vmem:[#allocation5 + $0x38] sm:$0xf]
    %v198 = vld [vmem:[#allocation5 + $0x3c] sm:$0xf]
    %v199 = vld [vmem:[%s4] sm:$0x1]
    %v201 = vlaneseq
    %v202 = vshrl.u32 %v201, 7
    %v203 = vsub.s32 0, %v202
    %v204 = vrot.slane %v199, %v203
    %v222 = vunpack.c.l.b16 %v183
    %v223 = vunpack.c.l.b16 %v184
    %v224 = vunpack.c.l.b16 %v185
    %v225 = vunpack.c.l.b16 %v186
    %v226 = vunpack.c.l.b16 %v187
    %v227 = vunpack.c.l.b16 %v188
    %v228 = vunpack.c.l.b16 %v189
    %v229 = vunpack.c.l.b16 %v190
    %v230 = vunpack.c.l.b16 %v191
    %v231 = vunpack.c.l.b16 %v192
    %v232 = vunpack.c.l.b16 %v193
    %v233 = vunpack.c.l.b16 %v194
    %v234 = vunpack.c.l.b16 %v195
    %v235 = vunpack.c.l.b16 %v196
    %v236 = vunpack.c.l.b16 %v197
    %v237 = vunpack.c.l.b16 %v198
    %v238 = vpack.c.b16 %v223, %v222
    %v239 = vpack.c.b16 %v225, %v224
    %v240 = vpack.c.b16 %v227, %v226
    %v241 = vpack.c.b16 %v229, %v228
    %v242 = vpack.c.b16 %v231, %v230
    %v243 = vpack.c.b16 %v233, %v232
    %v244 = vpack.c.b16 %v235, %v234
    %v245 = vpack.c.b16 %v237, %v236
    %254 = vmatprep.subr.bf16.mxu0 0
    %255 = vmatpush1.bf16.msra.mxu0 %v238
    %256 = vmatprep.subr.bf16.mxu0 0
    %257 = vmatpush1.bf16.msra.mxu0 %v239
    %258 = vmatprep.subr.bf16.mxu0 0
    %259 = vmatpush1.bf16.msra.mxu0 %v240
    %260 = vmatprep.subr.bf16.mxu0 0
    %261 = vmatpush1.bf16.msra.mxu0 %v241
    %262 = vmatprep.subr.bf16.mxu0 0
    %263 = vmatpush1.bf16.msra.mxu0 %v242
    %264 = vmatprep.subr.bf16.mxu0 0
    %265 = vmatpush1.bf16.msra.mxu0 %v243
    %266 = vmatprep.subr.bf16.mxu0 0
    %267 = vmatpush1.bf16.msra.mxu0 %v244
    %268 = vmatprep.subr.bf16.mxu0 0
    %269 = vmatpush1.bf16.msra.mxu0 %v245
    %270 = vmatprep.subr.bf16.mxu0 0
    %271 = vmatpush1.bf16.msra.mxu0 0
    %272 = vmatprep.subr.bf16.mxu0 0
    %273 = vmatpush1.bf16.msra.mxu0 0
    %274 = vmatprep.subr.bf16.mxu0 0
    %275 = vmatpush1.bf16.msra.mxu0 0
    %276 = vmatprep.subr.bf16.mxu0 0
    %277 = vmatpush1.bf16.msra.mxu0 0
    %278 = vmatprep.subr.bf16.mxu0 0
    %279 = vmatpush1.bf16.msra.mxu0 0
    %280 = vmatprep.subr.bf16.mxu0 0
    %281 = vmatpush1.bf16.msra.mxu0 0
    %282 = vmatprep.subr.bf16.mxu0 0
    %283 = vmatpush1.bf16.msra.mxu0 0
    %284 = vmatprep.subr.bf16.mxu0 0
    %285 = vmatpush1.bf16.msra.mxu0 0
    %286 = vmatprep.mubr.bf16.mxu0 0
    %287 = vmatmul.mubr.bf16.gmra.mrb[0].mxu0 %v182
    %v288 = vpop.f32.mrb[0].mxu0
    %v289 = vadd.f32 %v204, %v288
    %v290 = vpop.f32.mrb[0].mxu0
    %v291 = vpop.f32.mrb[0].mxu0
    %v292 = vpop.f32.mrb[0].mxu0
    %293 = vdwg.mxu0
    %v294 = vpack.c.bf16 %v289, %v289
    %v295 = vld [vmem:[#allocation7] sm:$0xf]
    %v296 = vld [vmem:[#allocation7 + $0x4] sm:$0xf]
    %v297 = vld [vmem:[#allocation7 + $0x8] sm:$0xf]
    %v298 = vld [vmem:[#allocation7 + $0xc] sm:$0xf]
    %v299 = vld [vmem:[#allocation7 + $0x10] sm:$0xf]
    %v300 = vld [vmem:[#allocation7 + $0x14] sm:$0xf]
    %v301 = vld [vmem:[#allocation7 + $0x18] sm:$0xf]
    %v302 = vld [vmem:[#allocation7 + $0x1c] sm:$0xf]
    %v303 = vld [vmem:[#allocation7 + $0x20] sm:$0xf]
    %v304 = vld [vmem:[#allocation7 + $0x24] sm:$0xf]
    %v305 = vld [vmem:[#allocation7 + $0x28] sm:$0xf]
    %v306 = vld [vmem:[#allocation7 + $0x2c] sm:$0xf]
    %v307 = vld [vmem:[#allocation7 + $0x30] sm:$0xf]
    %v308 = vld [vmem:[#allocation7 + $0x34] sm:$0xf]
    %v309 = vld [vmem:[#allocation7 + $0x38] sm:$0xf]
    %v310 = vld [vmem:[#allocation7 + $0x3c] sm:$0xf]
    %v311 = vld [vmem:[%s6] sm:$0x1]
    %v313 = vlaneseq
    %v314 = vshrl.u32 %v313, 7
    %v315 = vsub.s32 0, %v314
    %v316 = vrot.slane %v311, %v315
    %v334 = vunpack.c.l.b16 %v295
    %v335 = vunpack.c.l.b16 %v296
    %v336 = vunpack.c.l.b16 %v297
    %v337 = vunpack.c.l.b16 %v298
    %v338 = vunpack.c.l.b16 %v299
    %v339 = vunpack.c.l.b16 %v300
    %v340 = vunpack.c.l.b16 %v301
    %v341 = vunpack.c.l.b16 %v302
    %v342 = vunpack.c.l.b16 %v303
    %v343 = vunpack.c.l.b16 %v304
    %v344 = vunpack.c.l.b16 %v305
    %v345 = vunpack.c.l.b16 %v306
    %v346 = vunpack.c.l.b16 %v307
    %v347 = vunpack.c.l.b16 %v308
    %v348 = vunpack.c.l.b16 %v309
    %v349 = vunpack.c.l.b16 %v310
    %v350 = vpack.c.b16 %v335, %v334
    %v351 = vpack.c.b16 %v337, %v336
    %v352 = vpack.c.b16 %v339, %v338
    %v353 = vpack.c.b16 %v341, %v340
    %v354 = vpack.c.b16 %v343, %v342
    %v355 = vpack.c.b16 %v345, %v344
    %v356 = vpack.c.b16 %v347, %v346
    %v357 = vpack.c.b16 %v349, %v348
    %366 = vmatprep.subr.bf16.mxu0 0
    %367 = vmatpush1.bf16.msra.mxu0 %v350
    %368 = vmatprep.subr.bf16.mxu0 0
    %369 = vmatpush1.bf16.msra.mxu0 %v351
    %370 = vmatprep.subr.bf16.mxu0 0
    %371 = vmatpush1.bf16.msra.mxu0 %v352
    %372 = vmatprep.subr.bf16.mxu0 0
    %373 = vmatpush1.bf16.msra.mxu0 %v353
    %374 = vmatprep.subr.bf16.mxu0 0
    %375 = vmatpush1.bf16.msra.mxu0 %v354
    %376 = vmatprep.subr.bf16.mxu0 0
    %377 = vmatpush1.bf16.msra.mxu0 %v355
    %378 = vmatprep.subr.bf16.mxu0 0
    %379 = vmatpush1.bf16.msra.mxu0 %v356
    %380 = vmatprep.subr.bf16.mxu0 0
    %381 = vmatpush1.bf16.msra.mxu0 %v357
    %382 = vmatprep.subr.bf16.mxu0 0
    %383 = vmatpush1.bf16.msra.mxu0 0
    %384 = vmatprep.subr.bf16.mxu0 0
    %385 = vmatpush1.bf16.msra.mxu0 0
    %386 = vmatprep.subr.bf16.mxu0 0
    %387 = vmatpush1.bf16.msra.mxu0 0
    %388 = vmatprep.subr.bf16.mxu0 0
    %389 = vmatpush1.bf16.msra.mxu0 0
    %390 = vmatprep.subr.bf16.mxu0 0
    %391 = vmatpush1.bf16.msra.mxu0 0
    %392 = vmatprep.subr.bf16.mxu0 0
    %393 = vmatpush1.bf16.msra.mxu0 0
    %394 = vmatprep.subr.bf16.mxu0 0
    %395 = vmatpush1.bf16.msra.mxu0 0
    %396 = vmatprep.subr.bf16.mxu0 0
    %397 = vmatpush1.bf16.msra.mxu0 0
    %398 = vmatprep.mubr.bf16.mxu0 0
    %399 = vmatmul.mubr.bf16.gmra.mrb[0].mxu0 %v294
    %v400 = vpop.f32.mrb[0].mxu0
    %v401 = vadd.f32 %v316, %v400
    %v402 = vpop.f32.mrb[0].mxu0
    %v403 = vpop.f32.mrb[0].mxu0
    %v404 = vpop.f32.mrb[0].mxu0
    %405 = vdwg.mxu0
    %406 = vst [vmem:[#allocation8] sm:$0xff] %v401
    // Predicated region
    $region42: #{net0_forward.1} parent=1 // pred_check
      _
    $region43: #{net0_forward.1} parent=1 // pred_check_branch
      %408 = sbr.rel (0) target = $region45
    $region44: #{net0_forward.1} parent=1 // pred_region
      %s410 = ssub.s32 128, 128
      %411 = vsyncadd [#allocation4], %s410
      %s413 = sshll.u32 [#allocation8], 4
      %s414 = int_to_ptr.vmem [resolvable:$true] %s413
      %416 = dma.vmem_to_hbm [thread:$0]  %s414, 128, %s7, [#allocation4]
    $region45: #{net0_forward.1} parent=1 // pred_fallthru
      _
    // Predicated region
    $region46: #{net0_forward.1} parent=1 // pred_check
      _
    $region47: #{net0_forward.1} parent=1 // pred_check_branch
      %418 = sbr.rel (0) target = $region49
    $region48: #{net0_forward.1} parent=1 // pred_region
      %419 = dma.done [#allocation4], 128
    $region49: #{net0_forward.1} parent=1 // pred_fallthru
      _
    %420 = vsyncpa [#allocation3], 1
    %421 = vsyncpa [#allocation6], 1
    %422 = vsyncpa [#allocation4], 1

</llo_original>
